<compile_context>
chip_gen: v7x
topology: tpu7x:2x2x1
jax: 0.10.0
libtpu: 0.0.40
codegen_flags: <defaults>
</compile_context>

<pallas_src>
import functools

import jax
import jax.numpy as jnp
from jax.experimental import pallas as pl
from jax.experimental.pallas import tpu as pltpu


def _round_up(n, m):
    return ((n + m - 1) // m) * m


def _mlp_kernel(x_ref, w1_ref, b1_ref, w2_ref, b2_ref, w3_ref, b3_ref,
                w4_ref, b4_ref, o_ref):
    """One batch tile through fc1..fc4. bf16 MXU inputs, f32 accumulation."""
    x = x_ref[...]                                                   # (tb, 64) bf16

    # fc1 + ReLU   (dropout1: identity in eval mode)
    h = jnp.dot(x, w1_ref[...], preferred_element_type=jnp.float32)
    h = jnp.maximum(h + b1_ref[...], 0.0)

    # fc2 + ReLU   (dropout2: identity in eval mode)
    h = jnp.dot(h.astype(jnp.bfloat16), w2_ref[...],
                preferred_element_type=jnp.float32)
    h = jnp.maximum(h + b2_ref[...], 0.0)

    # fc3 + ReLU   (dropout3: identity in eval mode)
    h = jnp.dot(h.astype(jnp.bfloat16), w3_ref[...],
                preferred_element_type=jnp.float32)
    h = jnp.maximum(h + b3_ref[...], 0.0)

    # fc4 (logits, no activation)
    out = jnp.dot(h.astype(jnp.bfloat16), w4_ref[...],
                  preferred_element_type=jnp.float32)
    o_ref[...] = (out + b4_ref[...]).astype(o_ref.dtype)


def _prepare_params(params):
    """Pad w1's contraction dim 63->64 and cast weight streams to bf16."""
    return (
        jnp.pad(params["w1"], ((0, 1), (0, 0))).astype(jnp.bfloat16),  # (64, 128)
        params["b1"].astype(jnp.float32),
        params["w2"].astype(jnp.bfloat16),                             # (128, 128)
        params["b2"].astype(jnp.float32),
        params["w3"].astype(jnp.bfloat16),                             # (128, 64)
        params["b3"].astype(jnp.float32),
        params["w4"].astype(jnp.bfloat16),                             # (64, 7)
        params["b4"].astype(jnp.float32),
    )


@functools.partial(jax.jit, static_argnames=("tb",))
def hand_pose_classifier(x, params, *, tb=1024):
    """x: (B, 63) float32. params: dict from init_params. Returns (B, 7) f32."""
    B, K = x.shape
    assert K == 63, f"expected 63 input features, got {K}"

    w1, b1, w2, b2, w3, b3, w4, b4 = _prepare_params(params)

    # --- batch tiling: tile rows are a multiple of 8 sublanes ----------------
    tb = min(tb, _round_up(B, 8))
    pb = _round_up(B, tb)
    # Single fused pad (batch tail + feature 63->64) + bf16 cast: one HBM pass.
    xp = jnp.pad(x, ((0, pb - B), (0, 1))).astype(jnp.bfloat16)        # (pb, 64)
    grid = (pb // tb,)

    def tile_map(i):
        return (i, 0)

    def const_map(i):
        return (0, 0)

    in_specs = [
        pl.BlockSpec((tb, 64), tile_map),       # x tile (auto double-buffered)
        pl.BlockSpec(w1.shape, const_map),      # weights/biases: VMEM-resident
        pl.BlockSpec(b1.shape, const_map),
        pl.BlockSpec(w2.shape, const_map),
        pl.BlockSpec(b2.shape, const_map),
        pl.BlockSpec(w3.shape, const_map),
        pl.BlockSpec(b3.shape, const_map),
        pl.BlockSpec(w4.shape, const_map),
        pl.BlockSpec(b4.shape, const_map),
    ]
    out_spec = pl.BlockSpec((tb, 7), tile_map)

    out = pl.pallas_call(
        _mlp_kernel,
        out_shape=jax.ShapeDtypeStruct((pb, 7), jnp.float32),
        grid=grid,
        in_specs=in_specs,
        out_specs=out_spec,
        compiler_params=pltpu.CompilerParams(
            dimension_semantics=("parallel",)),   # megacore / 2-TC sharding
    )(xp, w1, b1, w2, b2, w3, b3, w4, b4)
    return out[:B]


def init_params(key):
    """Deterministic synthetic parameters matching the PyTorch module shapes."""
    dims = [(63, 128), (128, 128), (128, 64), (64, 7)]
    params = {}
    for i, (fan_in, fan_out) in enumerate(dims, start=1):
        key, kw, kb = jax.random.split(key, 3)
        bound = 1.0 / jnp.sqrt(fan_in)
        # Stored as (in, out): transpose of torch's (out, in) layout.
        params[f"w{i}"] = jax.random.uniform(
            kw, (fan_in, fan_out), jnp.float32, -bound, bound)
        params[f"b{i}"] = jax.random.uniform(
            kb, (1, fan_out), jnp.float32, -bound, bound)
    return params


def _reference_bf16(x, params):
    """Matches the kernel's numerics: bf16 matmul inputs, f32 accumulation."""
    def dot(a, w):
        return jnp.dot(a.astype(jnp.bfloat16), w.astype(jnp.bfloat16),
                       preferred_element_type=jnp.float32)
    h = jnp.maximum(dot(x, params["w1"]) + params["b1"], 0.0)
    h = jnp.maximum(dot(h, params["w2"]) + params["b2"], 0.0)
    h = jnp.maximum(dot(h, params["w3"]) + params["b3"], 0.0)
    return dot(h, params["w4"]) + params["b4"]


def _reference_f32(x, params):
    h = jnp.maximum(x @ params["w1"] + params["b1"], 0.0)
    h = jnp.maximum(h @ params["w2"] + params["b2"], 0.0)
    h = jnp.maximum(h @ params["w3"] + params["b3"], 0.0)
    return h @ params["w4"] + params["b4"]


if __name__ == "__main__":
    key = jax.random.PRNGKey(0)
    kp, kx1, kx2 = jax.random.split(key, 3)
    params = init_params(kp)

    # Small batch (single grid point).
    x_small = jax.random.normal(kx1, (8, 63), jnp.float32)
    out_small = jax.block_until_ready(hand_pose_classifier(x_small, params))
    assert out_small.shape == (8, 7)
    assert jnp.allclose(out_small, _reference_bf16(x_small, params),
                        atol=2e-3, rtol=2e-3), "mismatch vs bf16 reference"
    assert jnp.allclose(out_small, _reference_f32(x_small, params),
                        atol=5e-2, rtol=5e-2), "mismatch vs f32 reference"

    # Larger batch exercising multiple grid tiles + tail padding (tb=128).
    x_big = jax.random.normal(kx2, (300, 63), jnp.float32)
    out_big = jax.block_until_ready(hand_pose_classifier(x_big, params, tb=128))
    assert out_big.shape == (300, 7)
    assert jnp.allclose(out_big, _reference_bf16(x_big, params),
                        atol=2e-3, rtol=2e-3), "mismatch vs bf16 reference (tiled)"

    print("KERNEL_OK")
</pallas_src>

<mosaic_0001>
module attributes {stable_mosaic.version = 11 : i64} {
  func.func @_mlp_kernel(%arg0: i32, %arg1: memref<8x64xbf16, #tpu.memory_space<vmem>>, %arg2: memref<64x128xbf16, #tpu.memory_space<vmem>>, %arg3: memref<1x128xf32, #tpu.memory_space<vmem>>, %arg4: memref<128x128xbf16, #tpu.memory_space<vmem>>, %arg5: memref<1x128xf32, #tpu.memory_space<vmem>>, %arg6: memref<128x64xbf16, #tpu.memory_space<vmem>>, %arg7: memref<1x64xf32, #tpu.memory_space<vmem>>, %arg8: memref<64x7xbf16, #tpu.memory_space<vmem>>, %arg9: memref<1x7xf32, #tpu.memory_space<vmem>>, %arg10: memref<8x7xf32, #tpu.memory_space<vmem>>) attributes {dimension_semantics = [#tpu.dimension_semantics<parallel>], iteration_bounds = array<i64: 1>, scalar_prefetch = 0 : i64, scratch_operands = 0 : i64, tpu.core_type = #tpu.core_type<tc>, window_params = [{transform_indices = @transform_0, window_bounds = array<i64: 8, 64>}, {pipeline_mode = #tpu.pipeline_mode<synchronous>, transform_indices = @transform_1, window_bounds = array<i64: 64, 128>}, {pipeline_mode = #tpu.pipeline_mode<synchronous>, transform_indices = @transform_2, window_bounds = array<i64: 1, 128>}, {pipeline_mode = #tpu.pipeline_mode<synchronous>, transform_indices = @transform_3, window_bounds = array<i64: 128, 128>}, {pipeline_mode = #tpu.pipeline_mode<synchronous>, transform_indices = @transform_4, window_bounds = array<i64: 1, 128>}, {pipeline_mode = #tpu.pipeline_mode<synchronous>, transform_indices = @transform_5, window_bounds = array<i64: 128, 64>}, {pipeline_mode = #tpu.pipeline_mode<synchronous>, transform_indices = @transform_6, window_bounds = array<i64: 1, 64>}, {pipeline_mode = #tpu.pipeline_mode<synchronous>, transform_indices = @transform_7, window_bounds = array<i64: 64, 7>}, {pipeline_mode = #tpu.pipeline_mode<synchronous>, transform_indices = @transform_8, window_bounds = array<i64: 1, 7>}, {transform_indices = @transform_9, window_bounds = array<i64: 8, 7>}]} {
    %c0 = arith.constant 0 : index
    %c0_0 = arith.constant 0 : index
    %0 = vector.load %arg1[%c0, %c0_0] : memref<8x64xbf16, #tpu.memory_space<vmem>>, vector<8x64xbf16>
    %c0_1 = arith.constant 0 : index
    %c0_2 = arith.constant 0 : index
    %1 = vector.load %arg2[%c0_1, %c0_2] : memref<64x128xbf16, #tpu.memory_space<vmem>>, vector<64x128xbf16>
    %cst = arith.constant dense<0.000000e+00> : vector<8x128xf32>
    %2 = tpu.matmul %0, %1, %cst {dimension_numbers = #tpu.dot_dimension_numbers<[1], [0], [0], [1], [0, 0, 1, 1], [], []>} : vector<8x64xbf16>, vector<64x128xbf16>, vector<8x128xf32> -> vector<8x128xf32>
    %c0_3 = arith.constant 0 : index
    %c0_4 = arith.constant 0 : index
    %3 = vector.load %arg3[%c0_3, %c0_4] : memref<1x128xf32, #tpu.memory_space<vmem>>, vector<1x128xf32>
    %4 = vector.broadcast %3 : vector<1x128xf32> to vector<8x128xf32>
    %5 = arith.addf %2, %4 : vector<8x128xf32>
    %cst_5 = arith.constant 0.000000e+00 : f32
    %6 = vector.broadcast %cst_5 : f32 to vector<8x128xf32>
    %7 = arith.maximumf %5, %6 : vector<8x128xf32>
    %8 = arith.truncf %7 : vector<8x128xf32> to vector<8x128xbf16>
    %c0_6 = arith.constant 0 : index
    %c0_7 = arith.constant 0 : index
    %9 = vector.load %arg4[%c0_6, %c0_7] : memref<128x128xbf16, #tpu.memory_space<vmem>>, vector<128x128xbf16>
    %cst_8 = arith.constant dense<0.000000e+00> : vector<8x128xf32>
    %10 = tpu.matmul %8, %9, %cst_8 {dimension_numbers = #tpu.dot_dimension_numbers<[1], [0], [0], [1], [0, 0, 1, 1], [], []>} : vector<8x128xbf16>, vector<128x128xbf16>, vector<8x128xf32> -> vector<8x128xf32>
    %c0_9 = arith.constant 0 : index
    %c0_10 = arith.constant 0 : index
    %11 = vector.load %arg5[%c0_9, %c0_10] : memref<1x128xf32, #tpu.memory_space<vmem>>, vector<1x128xf32>
    %12 = vector.broadcast %11 : vector<1x128xf32> to vector<8x128xf32>
    %13 = arith.addf %10, %12 : vector<8x128xf32>
    %cst_11 = arith.constant 0.000000e+00 : f32
    %14 = vector.broadcast %cst_11 : f32 to vector<8x128xf32>
    %15 = arith.maximumf %13, %14 : vector<8x128xf32>
    %16 = arith.truncf %15 : vector<8x128xf32> to vector<8x128xbf16>
    %c0_12 = arith.constant 0 : index
    %c0_13 = arith.constant 0 : index
    %17 = vector.load %arg6[%c0_12, %c0_13] : memref<128x64xbf16, #tpu.memory_space<vmem>>, vector<128x64xbf16>
    %cst_14 = arith.constant dense<0.000000e+00> : vector<8x64xf32>
    %18 = tpu.matmul %16, %17, %cst_14 {dimension_numbers = #tpu.dot_dimension_numbers<[1], [0], [0], [1], [0, 0, 1, 1], [], []>} : vector<8x128xbf16>, vector<128x64xbf16>, vector<8x64xf32> -> vector<8x64xf32>
    %c0_15 = arith.constant 0 : index
    %c0_16 = arith.constant 0 : index
    %19 = vector.load %arg7[%c0_15, %c0_16] : memref<1x64xf32, #tpu.memory_space<vmem>>, vector<1x64xf32>
    %20 = vector.broadcast %19 : vector<1x64xf32> to vector<8x64xf32>
    %21 = arith.addf %18, %20 : vector<8x64xf32>
    %cst_17 = arith.constant 0.000000e+00 : f32
    %22 = vector.broadcast %cst_17 : f32 to vector<8x64xf32>
    %23 = arith.maximumf %21, %22 : vector<8x64xf32>
    %24 = arith.truncf %23 : vector<8x64xf32> to vector<8x64xbf16>
    %c0_18 = arith.constant 0 : index
    %c0_19 = arith.constant 0 : index
    %25 = vector.load %arg8[%c0_18, %c0_19] : memref<64x7xbf16, #tpu.memory_space<vmem>>, vector<64x7xbf16>
    %cst_20 = arith.constant dense<0.000000e+00> : vector<8x7xf32>
    %26 = tpu.matmul %24, %25, %cst_20 {dimension_numbers = #tpu.dot_dimension_numbers<[1], [0], [0], [1], [0, 0, 1, 1], [], []>} : vector<8x64xbf16>, vector<64x7xbf16>, vector<8x7xf32> -> vector<8x7xf32>
    %c0_21 = arith.constant 0 : index
    %c0_22 = arith.constant 0 : index
    %27 = vector.load %arg9[%c0_21, %c0_22] : memref<1x7xf32, #tpu.memory_space<vmem>>, vector<1x7xf32>
    %28 = vector.broadcast %27 : vector<1x7xf32> to vector<8x7xf32>
    %29 = arith.addf %26, %28 : vector<8x7xf32>
    %c0_23 = arith.constant 0 : index
    %c0_24 = arith.constant 0 : index
    %30 = vector.load %arg10[%c0_23, %c0_24] : memref<8x7xf32, #tpu.memory_space<vmem>>, vector<8x7xf32>
    tpu.vector_store %arg10[%c0_23, %c0_24], %29 {strides = array<i32>} : memref<8x7xf32, #tpu.memory_space<vmem>>, vector<8x7xf32>,
    return
  }
  func.func @transform_0(%arg0: i32) -> (i32, i32) {
    %c0_i32 = arith.constant 0 : i32
    %c0_i32_0 = arith.constant 0 : i32
    return %arg0, %c0_i32 : i32, i32
  }
  func.func @transform_1(%arg0: i32) -> (i32, i32) {
    %c0_i32 = arith.constant 0 : i32
    %c0_i32_0 = arith.constant 0 : i32
    %c0_i32_1 = arith.constant 0 : i32
    return %c0_i32, %c0_i32_0 : i32, i32
  }
  func.func @transform_2(%arg0: i32) -> (i32, i32) {
    %c0_i32 = arith.constant 0 : i32
    %c0_i32_0 = arith.constant 0 : i32
    %c0_i32_1 = arith.constant 0 : i32
    return %c0_i32, %c0_i32_0 : i32, i32
  }
  func.func @transform_3(%arg0: i32) -> (i32, i32) {
    %c0_i32 = arith.constant 0 : i32
    %c0_i32_0 = arith.constant 0 : i32
    %c0_i32_1 = arith.constant 0 : i32
    return %c0_i32, %c0_i32_0 : i32, i32
  }
  func.func @transform_4(%arg0: i32) -> (i32, i32) {
    %c0_i32 = arith.constant 0 : i32
    %c0_i32_0 = arith.constant 0 : i32
    %c0_i32_1 = arith.constant 0 : i32
    return %c0_i32, %c0_i32_0 : i32, i32
  }
  func.func @transform_5(%arg0: i32) -> (i32, i32) {
    %c0_i32 = arith.constant 0 : i32
    %c0_i32_0 = arith.constant 0 : i32
    %c0_i32_1 = arith.constant 0 : i32
    return %c0_i32, %c0_i32_0 : i32, i32
  }
  func.func @transform_6(%arg0: i32) -> (i32, i32) {
    %c0_i32 = arith.constant 0 : i32
    %c0_i32_0 = arith.constant 0 : i32
    %c0_i32_1 = arith.constant 0 : i32
    return %c0_i32, %c0_i32_0 : i32, i32
  }
  func.func @transform_7(%arg0: i32) -> (i32, i32) {
    %c0_i32 = arith.constant 0 : i32
    %c0_i32_0 = arith.constant 0 : i32
    %c0_i32_1 = arith.constant 0 : i32
    return %c0_i32, %c0_i32_0 : i32, i32
  }
  func.func @transform_8(%arg0: i32) -> (i32, i32) {
    %c0_i32 = arith.constant 0 : i32
    %c0_i32_0 = arith.constant 0 : i32
    %c0_i32_1 = arith.constant 0 : i32
    return %c0_i32, %c0_i32_0 : i32, i32
  }
  func.func @transform_9(%arg0: i32) -> (i32, i32) {
    %c0_i32 = arith.constant 0 : i32
    %c0_i32_0 = arith.constant 0 : i32
    return %arg0, %c0_i32 : i32, i32
  }
}

</mosaic_0001>

<llo_original>
// kernel: hand_pose_classifier.1
$region0: #{hand_pose_classifier.1}
  #allocation0 [shape = 'u32[]', space=smem, size = 0x4, offset = 0x4, fixed_abs, tag = 'smem constant byte address 0x4 - core index']
  #allocation1 [shape = 'u32[144,128]{1,0:T(1,128)}', space=vmem, size = 0x12000, scoped, tag = 'internal scratch']
  %s0 = inlined_call_operand.vmem [shape: bf16[8,64], index: 0, kind: input, shape index: {}]
  %s1 = inlined_call_operand.vmem [shape: bf16[64,128], index: 1, kind: input, shape index: {}]
  %s2 = inlined_call_operand.vmem [shape: f32[1,128], index: 2, kind: input, shape index: {}]
  %s3 = inlined_call_operand.vmem [shape: bf16[128,128], index: 3, kind: input, shape index: {}]
  %s4 = inlined_call_operand.vmem [shape: f32[1,128], index: 4, kind: input, shape index: {}]
  %s5 = inlined_call_operand.vmem [shape: bf16[128,64], index: 5, kind: input, shape index: {}]
  %s6 = inlined_call_operand.vmem [shape: f32[1,64], index: 6, kind: input, shape index: {}]
  %s7 = inlined_call_operand.vmem [shape: bf16[64,7], index: 7, kind: input, shape index: {}]
  %s8 = inlined_call_operand.vmem [shape: f32[1,7], index: 8, kind: input, shape index: {}]
  %s9 = inlined_call_operand.hbm [shape: f32[8,7], index: 9, kind: output, shape index: {}]
  %s10 = sld [smem:[#allocation0]]
  $region46: #{hand_pose_classifier.1} parent=0
    _
  %s12 = ssub.s32 1, %s10
  %s13 = scalar_select 0, %s12, %s10
  $region1: #{hand_pose_classifier.1} parent=0
    #allocation2 [shape = 'u8[4096]{0}', space=vmem, size = 0x1000, scoped, tag = 'output window, operand 0, single buffered']
    #allocation3 [shape = 's32[1]{0}', space=sflag, size = 0x4, scoped, tag = 'scoped memory for hand_pose_classifier.1']
    %14 = vsyncpa [#allocation3], 0
    // Predicated region
    $region2: #{hand_pose_classifier.1} parent=1 // pred_check
      _
    $region3: #{hand_pose_classifier.1} parent=1 // pred_check_branch
      %16 = sbr.rel (0) target = $region5
    $region4: #{hand_pose_classifier.1} parent=1 // pred_region
      _
    $region5: #{hand_pose_classifier.1} parent=1 // pred_fallthru
      _
    // Predicated region
    $region6: #{hand_pose_classifier.1} parent=1 // pred_check
      _
    $region7: #{hand_pose_classifier.1} parent=1 // pred_check_branch
      %18 = sbr.rel (0) target = $region9
    $region8: #{hand_pose_classifier.1} parent=1 // pred_region
      _
    $region9: #{hand_pose_classifier.1} parent=1 // pred_fallthru
      _
    // Predicated region
    $region10: #{hand_pose_classifier.1} parent=1 // pred_check
      _
    $region11: #{hand_pose_classifier.1} parent=1 // pred_check_branch
      %20 = sbr.rel (0) target = $region13
    $region12: #{hand_pose_classifier.1} parent=1 // pred_region
      _
    $region13: #{hand_pose_classifier.1} parent=1 // pred_fallthru
      _
    // Predicated region
    $region14: #{hand_pose_classifier.1} parent=1 // pred_check
      _
    $region15: #{hand_pose_classifier.1} parent=1 // pred_check_branch
      %22 = sbr.rel (0) target = $region17
    $region16: #{hand_pose_classifier.1} parent=1 // pred_region
      _
    $region17: #{hand_pose_classifier.1} parent=1 // pred_fallthru
      _
    // Predicated region
    $region18: #{hand_pose_classifier.1} parent=1 // pred_check
      _
    $region19: #{hand_pose_classifier.1} parent=1 // pred_check_branch
      %24 = sbr.rel (0) target = $region21
    $region20: #{hand_pose_classifier.1} parent=1 // pred_region
      _
    $region21: #{hand_pose_classifier.1} parent=1 // pred_fallthru
      _
    // Predicated region
    $region22: #{hand_pose_classifier.1} parent=1 // pred_check
      _
    $region23: #{hand_pose_classifier.1} parent=1 // pred_check_branch
      %26 = sbr.rel (0) target = $region25
    $region24: #{hand_pose_classifier.1} parent=1 // pred_region
      _
    $region25: #{hand_pose_classifier.1} parent=1 // pred_fallthru
      _
    // Predicated region
    $region26: #{hand_pose_classifier.1} parent=1 // pred_check
      _
    $region27: #{hand_pose_classifier.1} parent=1 // pred_check_branch
      %28 = sbr.rel (0) target = $region29
    $region28: #{hand_pose_classifier.1} parent=1 // pred_region
      _
    $region29: #{hand_pose_classifier.1} parent=1 // pred_fallthru
      _
    // Predicated region
    $region30: #{hand_pose_classifier.1} parent=1 // pred_check
      _
    $region31: #{hand_pose_classifier.1} parent=1 // pred_check_branch
      %30 = sbr.rel (0) target = $region33
    $region32: #{hand_pose_classifier.1} parent=1 // pred_region
      _
    $region33: #{hand_pose_classifier.1} parent=1 // pred_fallthru
      _
    // Predicated region
    $region34: #{hand_pose_classifier.1} parent=1 // pred_check
      _
    $region35: #{hand_pose_classifier.1} parent=1 // pred_check_branch
      %32 = sbr.rel (0) target = $region37
    $region36: #{hand_pose_classifier.1} parent=1 // pred_region
      _
    $region37: #{hand_pose_classifier.1} parent=1 // pred_fallthru
      _
    %v34 = vld [vmem:[%s0] sm:$0xf]
    %v35 = vld [vmem:[%s1] sm:$0xf]
    %v36 = vld [vmem:[%s1 + $0x4] sm:$0xf]
    %v37 = vld [vmem:[%s1 + $0x8] sm:$0xf]
    %v38 = vld [vmem:[%s1 + $0xc] sm:$0xf]
    %v39 = vld [vmem:[%s1 + $0x10] sm:$0xf]
    %v40 = vld [vmem:[%s1 + $0x14] sm:$0xf]
    %v41 = vld [vmem:[%s1 + $0x18] sm:$0xf]
    %v42 = vld [vmem:[%s1 + $0x1c] sm:$0xf]
    %v43 = vld [vmem:[%s2] sm:$0x1]
    %v45 = vlaneseq
    %v46 = vshrl.u32 %v45, 7
    %v47 = vsub.s32 0, %v46
    %v48 = vrot.slane %v43, %v47
    %v58 = vunpack.c.l.b16 %v35
    %v59 = vunpack.c.l.b16 %v36
    %v60 = vunpack.c.l.b16 %v37
    %v61 = vunpack.c.l.b16 %v38
    %v62 = vunpack.c.l.b16 %v39
    %v63 = vunpack.c.l.b16 %v40
    %v64 = vunpack.c.l.b16 %v41
    %v65 = vunpack.c.l.b16 %v42
    %v66 = vpack.c.b16 %v59, %v58
    %v67 = vpack.c.b16 %v61, %v60
    %v68 = vpack.c.b16 %v63, %v62
    %v69 = vpack.c.b16 %v65, %v64
    %vm74 = vcmask 523264
    %v76 = vsel %vm74, %v34, 0
    %78 = vmatprep.subr.bf16.mxu0 0
    %79 = vmatpush1.bf16.msra.mxu0 %v66
    %80 = vmatprep.subr.bf16.mxu0 0
    %81 = vmatpush1.bf16.msra.mxu0 %v67
    %82 = vmatprep.subr.bf16.mxu0 0
    %83 = vmatpush1.bf16.msra.mxu0 %v68
    %84 = vmatprep.subr.bf16.mxu0 0
    %85 = vmatpush1.bf16.msra.mxu0 %v69
    %86 = vmatprep.subr.bf16.mxu0 0
    %87 = vmatpush1.bf16.msra.mxu0 0
    %88 = vmatprep.subr.bf16.mxu0 0
    %89 = vmatpush1.bf16.msra.mxu0 0
    %90 = vmatprep.subr.bf16.mxu0 0
    %91 = vmatpush1.bf16.msra.mxu0 0
    %92 = vmatprep.subr.bf16.mxu0 0
    %93 = vmatpush1.bf16.msra.mxu0 0
    %94 = vmatprep.subr.bf16.mxu0 0
    %95 = vmatpush1.bf16.msra.mxu0 0
    %96 = vmatprep.subr.bf16.mxu0 0
    %97 = vmatpush1.bf16.msra.mxu0 0
    %98 = vmatprep.subr.bf16.mxu0 0
    %99 = vmatpush1.bf16.msra.mxu0 0
    %100 = vmatprep.subr.bf16.mxu0 0
    %101 = vmatpush1.bf16.msra.mxu0 0
    %102 = vmatprep.subr.bf16.mxu0 0
    %103 = vmatpush1.bf16.msra.mxu0 0
    %104 = vmatprep.subr.bf16.mxu0 0
    %105 = vmatpush1.bf16.msra.mxu0 0
    %106 = vmatprep.subr.bf16.mxu0 0
    %107 = vmatpush1.bf16.msra.mxu0 0
    %108 = vmatprep.subr.bf16.mxu0 0
    %109 = vmatpush1.bf16.msra.mxu0 0
    %110 = vmatprep.mubr.bf16.mxu0 0
    %111 = vmatmul.mubr.bf16.gmra.mrb[0].mxu0 %v76
    %v112 = vpop.f32.mrb[0].mxu0
    %v113 = vadd.f32 %v48, %v112
    %v114 = vpop.f32.mrb[0].mxu0
    %v115 = vpop.f32.mrb[0].mxu0
    %v116 = vpop.f32.mrb[0].mxu0
    %117 = vdwg.mxu0
    %v118 = vmax.f32 %v113, 0.0
    %v119 = vpack.c.bf16 %v118, %v118
    %v120 = vld [vmem:[%s3] sm:$0xf]
    %v121 = vld [vmem:[%s3 + $0x4] sm:$0xf]
    %v122 = vld [vmem:[%s3 + $0x8] sm:$0xf]
    %v123 = vld [vmem:[%s3 + $0xc] sm:$0xf]
    %v124 = vld [vmem:[%s3 + $0x10] sm:$0xf]
    %v125 = vld [vmem:[%s3 + $0x14] sm:$0xf]
    %v126 = vld [vmem:[%s3 + $0x18] sm:$0xf]
    %v127 = vld [vmem:[%s3 + $0x1c] sm:$0xf]
    %v128 = vld [vmem:[%s3 + $0x20] sm:$0xf]
    %v129 = vld [vmem:[%s3 + $0x24] sm:$0xf]
    %v130 = vld [vmem:[%s3 + $0x28] sm:$0xf]
    %v131 = vld [vmem:[%s3 + $0x2c] sm:$0xf]
    %v132 = vld [vmem:[%s3 + $0x30] sm:$0xf]
    %v133 = vld [vmem:[%s3 + $0x34] sm:$0xf]
    %v134 = vld [vmem:[%s3 + $0x38] sm:$0xf]
    %v135 = vld [vmem:[%s3 + $0x3c] sm:$0xf]
    %v136 = vld [vmem:[%s4] sm:$0x1]
    %v138 = vlaneseq
    %v139 = vshrl.u32 %v138, 7
    %v140 = vsub.s32 0, %v139
    %v141 = vrot.slane %v136, %v140
    %v159 = vunpack.c.l.b16 %v120
    %v160 = vunpack.c.l.b16 %v121
    %v161 = vunpack.c.l.b16 %v122
    %v162 = vunpack.c.l.b16 %v123
    %v163 = vunpack.c.l.b16 %v124
    %v164 = vunpack.c.l.b16 %v125
    %v165 = vunpack.c.l.b16 %v126
    %v166 = vunpack.c.l.b16 %v127
    %v167 = vunpack.c.l.b16 %v128
    %v168 = vunpack.c.l.b16 %v129
    %v169 = vunpack.c.l.b16 %v130
    %v170 = vunpack.c.l.b16 %v131
    %v171 = vunpack.c.l.b16 %v132
    %v172 = vunpack.c.l.b16 %v133
    %v173 = vunpack.c.l.b16 %v134
    %v174 = vunpack.c.l.b16 %v135
    %v175 = vpack.c.b16 %v160, %v159
    %v176 = vpack.c.b16 %v162, %v161
    %v177 = vpack.c.b16 %v164, %v163
    %v178 = vpack.c.b16 %v166, %v165
    %v179 = vpack.c.b16 %v168, %v167
    %v180 = vpack.c.b16 %v170, %v169
    %v181 = vpack.c.b16 %v172, %v171
    %v182 = vpack.c.b16 %v174, %v173
    %191 = vmatprep.subr.bf16.mxu0 0
    %192 = vmatpush1.bf16.msra.mxu0 %v175
    %193 = vmatprep.subr.bf16.mxu0 0
    %194 = vmatpush1.bf16.msra.mxu0 %v176
    %195 = vmatprep.subr.bf16.mxu0 0
    %196 = vmatpush1.bf16.msra.mxu0 %v177
    %197 = vmatprep.subr.bf16.mxu0 0
    %198 = vmatpush1.bf16.msra.mxu0 %v178
    %199 = vmatprep.subr.bf16.mxu0 0
    %200 = vmatpush1.bf16.msra.mxu0 %v179
    %201 = vmatprep.subr.bf16.mxu0 0
    %202 = vmatpush1.bf16.msra.mxu0 %v180
    %203 = vmatprep.subr.bf16.mxu0 0
    %204 = vmatpush1.bf16.msra.mxu0 %v181
    %205 = vmatprep.subr.bf16.mxu0 0
    %206 = vmatpush1.bf16.msra.mxu0 %v182
    %207 = vmatprep.subr.bf16.mxu0 0
    %208 = vmatpush1.bf16.msra.mxu0 0
    %209 = vmatprep.subr.bf16.mxu0 0
    %210 = vmatpush1.bf16.msra.mxu0 0
    %211 = vmatprep.subr.bf16.mxu0 0
    %212 = vmatpush1.bf16.msra.mxu0 0
    %213 = vmatprep.subr.bf16.mxu0 0
    %214 = vmatpush1.bf16.msra.mxu0 0
    %215 = vmatprep.subr.bf16.mxu0 0
    %216 = vmatpush1.bf16.msra.mxu0 0
    %217 = vmatprep.subr.bf16.mxu0 0
    %218 = vmatpush1.bf16.msra.mxu0 0
    %219 = vmatprep.subr.bf16.mxu0 0
    %220 = vmatpush1.bf16.msra.mxu0 0
    %221 = vmatprep.subr.bf16.mxu0 0
    %222 = vmatpush1.bf16.msra.mxu0 0
    %223 = vmatprep.mubr.bf16.mxu0 0
    %224 = vmatmul.mubr.bf16.gmra.mrb[0].mxu0 %v119
    %v225 = vpop.f32.mrb[0].mxu0
    %v226 = vadd.f32 %v141, %v225
    %v227 = vpop.f32.mrb[0].mxu0
    %v228 = vpop.f32.mrb[0].mxu0
    %v229 = vpop.f32.mrb[0].mxu0
    %230 = vdwg.mxu0
    %v231 = vmax.f32 %v226, 0.0
    %v232 = vpack.c.bf16 %v231, %v231
    %v233 = vld [vmem:[%s5] sm:$0xf]
    %v234 = vld [vmem:[%s5 + $0x4] sm:$0xf]
    %v235 = vld [vmem:[%s5 + $0x8] sm:$0xf]
    %v236 = vld [vmem:[%s5 + $0xc] sm:$0xf]
    %v237 = vld [vmem:[%s5 + $0x10] sm:$0xf]
    %v238 = vld [vmem:[%s5 + $0x14] sm:$0xf]
    %v239 = vld [vmem:[%s5 + $0x18] sm:$0xf]
    %v240 = vld [vmem:[%s5 + $0x1c] sm:$0xf]
    %v241 = vld [vmem:[%s5 + $0x20] sm:$0xf]
    %v242 = vld [vmem:[%s5 + $0x24] sm:$0xf]
    %v243 = vld [vmem:[%s5 + $0x28] sm:$0xf]
    %v244 = vld [vmem:[%s5 + $0x2c] sm:$0xf]
    %v245 = vld [vmem:[%s5 + $0x30] sm:$0xf]
    %v246 = vld [vmem:[%s5 + $0x34] sm:$0xf]
    %v247 = vld [vmem:[%s5 + $0x38] sm:$0xf]
    %v248 = vld [vmem:[%s5 + $0x3c] sm:$0xf]
    %v249 = vld [vmem:[%s6] sm:$0x1]
    %v251 = vlaneseq
    %v252 = vshrl.u32 %v251, 7
    %v253 = vsub.s32 0, %v252
    %v254 = vrot.slane %v249, %v253
    %v272 = vunpack.c.l.b16 %v233
    %v273 = vunpack.c.l.b16 %v234
    %v274 = vunpack.c.l.b16 %v235
    %v275 = vunpack.c.l.b16 %v236
    %v276 = vunpack.c.l.b16 %v237
    %v277 = vunpack.c.l.b16 %v238
    %v278 = vunpack.c.l.b16 %v239
    %v279 = vunpack.c.l.b16 %v240
    %v280 = vunpack.c.l.b16 %v241
    %v281 = vunpack.c.l.b16 %v242
    %v282 = vunpack.c.l.b16 %v243
    %v283 = vunpack.c.l.b16 %v244
    %v284 = vunpack.c.l.b16 %v245
    %v285 = vunpack.c.l.b16 %v246
    %v286 = vunpack.c.l.b16 %v247
    %v287 = vunpack.c.l.b16 %v248
    %v288 = vpack.c.b16 %v273, %v272
    %v289 = vpack.c.b16 %v275, %v274
    %v290 = vpack.c.b16 %v277, %v276
    %v291 = vpack.c.b16 %v279, %v278
    %v292 = vpack.c.b16 %v281, %v280
    %v293 = vpack.c.b16 %v283, %v282
    %v294 = vpack.c.b16 %v285, %v284
    %v295 = vpack.c.b16 %v287, %v286
    %304 = vmatprep.subr.bf16.mxu0 0
    %305 = vmatpush1.bf16.msra.mxu0 %v288
    %306 = vmatprep.subr.bf16.mxu0 0
    %307 = vmatpush1.bf16.msra.mxu0 %v289
    %308 = vmatprep.subr.bf16.mxu0 0
    %309 = vmatpush1.bf16.msra.mxu0 %v290
    %310 = vmatprep.subr.bf16.mxu0 0
    %311 = vmatpush1.bf16.msra.mxu0 %v291
    %312 = vmatprep.subr.bf16.mxu0 0
    %313 = vmatpush1.bf16.msra.mxu0 %v292
    %314 = vmatprep.subr.bf16.mxu0 0
    %315 = vmatpush1.bf16.msra.mxu0 %v293
    %316 = vmatprep.subr.bf16.mxu0 0
    %317 = vmatpush1.bf16.msra.mxu0 %v294
    %318 = vmatprep.subr.bf16.mxu0 0
    %319 = vmatpush1.bf16.msra.mxu0 %v295
    %320 = vmatprep.subr.bf16.mxu0 0
    %321 = vmatpush1.bf16.msra.mxu0 0
    %322 = vmatprep.subr.bf16.mxu0 0
    %323 = vmatpush1.bf16.msra.mxu0 0
    %324 = vmatprep.subr.bf16.mxu0 0
    %325 = vmatpush1.bf16.msra.mxu0 0
    %326 = vmatprep.subr.bf16.mxu0 0
    %327 = vmatpush1.bf16.msra.mxu0 0
    %328 = vmatprep.subr.bf16.mxu0 0
    %329 = vmatpush1.bf16.msra.mxu0 0
    %330 = vmatprep.subr.bf16.mxu0 0
    %331 = vmatpush1.bf16.msra.mxu0 0
    %332 = vmatprep.subr.bf16.mxu0 0
    %333 = vmatpush1.bf16.msra.mxu0 0
    %334 = vmatprep.subr.bf16.mxu0 0
    %335 = vmatpush1.bf16.msra.mxu0 0
    %336 = vmatprep.mubr.bf16.mxu0 0
    %337 = vmatmul.mubr.bf16.gmra.mrb[0].mxu0 %v232
    %v338 = vpop.f32.mrb[0].mxu0
    %v339 = vadd.f32 %v254, %v338
    %v340 = vpop.f32.mrb[0].mxu0
    %v341 = vpop.f32.mrb[0].mxu0
    %v342 = vpop.f32.mrb[0].mxu0
    %343 = vdwg.mxu0
    %v344 = vmax.f32 %v339, 0.0
    %v345 = vpack.c.bf16 %v344, %v344
    %v346 = vld [vmem:[%s7] sm:$0xf]
    %v347 = vld [vmem:[%s7 + $0x4] sm:$0xf]
    %v348 = vld [vmem:[%s7 + $0x8] sm:$0xf]
    %v349 = vld [vmem:[%s7 + $0xc] sm:$0xf]
    %v350 = vld [vmem:[%s7 + $0x10] sm:$0xf]
    %v351 = vld [vmem:[%s7 + $0x14] sm:$0xf]
    %v352 = vld [vmem:[%s7 + $0x18] sm:$0xf]
    %v353 = vld [vmem:[%s7 + $0x1c] sm:$0xf]
    %v354 = vld [vmem:[%s8] sm:$0x1]
    %v356 = vlaneseq
    %v357 = vshrl.u32 %v356, 7
    %v358 = vsub.s32 0, %v357
    %v359 = vrot.slane %v354, %v358
    %v369 = vunpack.c.l.b16 %v346
    %v370 = vunpack.c.l.b16 %v347
    %v371 = vunpack.c.l.b16 %v348
    %v372 = vunpack.c.l.b16 %v349
    %v373 = vunpack.c.l.b16 %v350
    %v374 = vunpack.c.l.b16 %v351
    %v375 = vunpack.c.l.b16 %v352
    %v376 = vunpack.c.l.b16 %v353
    %v377 = vpack.c.b16 %v370, %v369
    %v378 = vpack.c.b16 %v372, %v371
    %v379 = vpack.c.b16 %v374, %v373
    %v380 = vpack.c.b16 %v376, %v375
    %v386 = vsel %vm74, %v345, 0
    %388 = vmatprep.subr.bf16.mxu0 0
    %389 = vmatpush1.bf16.msra.mxu0 %v377
    %390 = vmatprep.subr.bf16.mxu0 0
    %391 = vmatpush1.bf16.msra.mxu0 %v378
    %392 = vmatprep.subr.bf16.mxu0 0
    %393 = vmatpush1.bf16.msra.mxu0 %v379
    %394 = vmatprep.subr.bf16.mxu0 0
    %395 = vmatpush1.bf16.msra.mxu0 %v380
    %396 = vmatprep.subr.bf16.mxu0 0
    %397 = vmatpush1.bf16.msra.mxu0 0
    %398 = vmatprep.subr.bf16.mxu0 0
    %399 = vmatpush1.bf16.msra.mxu0 0
    %400 = vmatprep.subr.bf16.mxu0 0
    %401 = vmatpush1.bf16.msra.mxu0 0
    %402 = vmatprep.subr.bf16.mxu0 0
    %403 = vmatpush1.bf16.msra.mxu0 0
    %404 = vmatprep.subr.bf16.mxu0 0
    %405 = vmatpush1.bf16.msra.mxu0 0
    %406 = vmatprep.subr.bf16.mxu0 0
    %407 = vmatpush1.bf16.msra.mxu0 0
    %408 = vmatprep.subr.bf16.mxu0 0
    %409 = vmatpush1.bf16.msra.mxu0 0
    %410 = vmatprep.subr.bf16.mxu0 0
    %411 = vmatpush1.bf16.msra.mxu0 0
    %412 = vmatprep.subr.bf16.mxu0 0
    %413 = vmatpush1.bf16.msra.mxu0 0
    %414 = vmatprep.subr.bf16.mxu0 0
    %415 = vmatpush1.bf16.msra.mxu0 0
    %416 = vmatprep.subr.bf16.mxu0 0
    %417 = vmatpush1.bf16.msra.mxu0 0
    %418 = vmatprep.subr.bf16.mxu0 0
    %419 = vmatpush1.bf16.msra.mxu0 0
    %420 = vmatprep.mubr.bf16.mxu0 0
    %421 = vmatmul.mubr.bf16.gmra.mrb[0].mxu0 %v386
    %v422 = vpop.f32.mrb[0].mxu0
    %v423 = vadd.f32 %v359, %v422
    %v424 = vpop.f32.mrb[0].mxu0
    %v425 = vpop.f32.mrb[0].mxu0
    %v426 = vpop.f32.mrb[0].mxu0
    %427 = vdwg.mxu0
    %vm428 = vcmask 56320
    %429 = vst.msk [vmem:[#allocation2] sm:$0xff] %vm428, %v423
    // Predicated region
    $region38: #{hand_pose_classifier.1} parent=1 // pred_check
      _
    $region39: #{hand_pose_classifier.1} parent=1 // pred_check_branch
      %431 = sbr.rel (0) target = $region41
    $region40: #{hand_pose_classifier.1} parent=1 // pred_region
      %s433 = ssub.s32 128, 128
      %434 = vsyncadd [#allocation3], %s433
      %s436 = sshll.u32 [#allocation2], 4
      %s437 = int_to_ptr.vmem [resolvable:$true] %s436
      %439 = dma.vmem_to_hbm [thread:$0]  %s437, 128, %s9, [#allocation3]
    $region41: #{hand_pose_classifier.1} parent=1 // pred_fallthru
      _
    // Predicated region
    $region42: #{hand_pose_classifier.1} parent=1 // pred_check
      _
    $region43: #{hand_pose_classifier.1} parent=1 // pred_check_branch
      %441 = sbr.rel (0) target = $region45
    $region44: #{hand_pose_classifier.1} parent=1 // pred_region
      %442 = dma.done [#allocation3], 128
    $region45: #{hand_pose_classifier.1} parent=1 // pred_fallthru
      _
    %443 = vsyncpa [#allocation3], 1

</llo_original>
